<compile_context>
chip_gen: v5e
topology: v5e:2x2
jax: 0.10.0
libtpu: 0.0.40
codegen_flags: <defaults>
</compile_context>

<pallas_src>
import jax
import jax.numpy as jnp
from jax.experimental import pallas as pl
from jax.experimental.pallas import tpu as pltpu  # noqa: F401  (TPU backend)

NUM_I = 1 * 4
NUM_H1 = 16
BN_EPS = 1e-5
NUM_P = NUM_I + 2  # packed params: NUM_I columns of W^T, then gamma, then beta


def mlp_bn_kernel(xt_ref, p_ref, ot_ref):
    # xt_ref: (NUM_I, B)      f32   (feature-major input, batch on lanes)
    # p_ref : (NUM_H1, NUM_P) f32   cols [0:NUM_I] = W^T, col NUM_I = gamma,
    #                               col NUM_I+1 = beta
    # ot_ref: (NUM_H1, B)     f32   (feature-major output, lane-dense in B)
    xt = xt_ref[...]
    p = p_ref[...]

    gamma = p[:, NUM_I:NUM_I + 1]        # (NUM_H1, 1)
    beta = p[:, NUM_I + 1:NUM_I + 2]     # (NUM_H1, 1)

    # Linear layer as K=NUM_I unrolled VPU FMAs (no MXU round-trip).
    #   y[h, b] = sum_k W[k, h] * x[b, k]
    # p[:, k:k+1] lane-broadcasts across B (loop-invariant w.r.t. the batch),
    # xt[k:k+1, :] sublane-broadcasts across the 16 features.
    # Linear bias omitted: it cancels under training-mode BatchNorm.
    y = p[:, 0:1] * xt[0:1, :]
    for k in range(1, NUM_I):
        y = y + p[:, k:k + 1] * xt[k:k + 1, :]

    # BatchNorm1d (training mode): biased batch statistics over the batch
    # (lane) axis, centered two-pass variance for numerical safety.
    inv_b = 1.0 / xt.shape[1]
    mean = jnp.sum(y, axis=1, keepdims=True) * inv_b          # (NUM_H1, 1)
    d = y - mean
    var = jnp.sum(d * d, axis=1, keepdims=True) * inv_b       # (NUM_H1, 1)
    scale = gamma * jax.lax.rsqrt(var + BN_EPS)
    ot_ref[...] = (d * scale + beta).astype(ot_ref.dtype)


def make_mlp_bn(w, b, gamma, beta):
    """Build a jitted forward with parameters packed ONCE at construction.

    w: (NUM_I, NUM_H1); b: (NUM_H1,) or (1, NUM_H1) [unused: cancels under BN];
    gamma/beta: (NUM_H1,).
    Returned forward: x (B, NUM_I) -> (B, NUM_H1), matching torch semantics.
    """
    del b  # linear bias cancels exactly under training-mode BatchNorm
    params = jnp.concatenate(
        [w.T.astype(jnp.float32),                       # (NUM_H1, NUM_I)
         gamma.reshape(NUM_H1, 1).astype(jnp.float32),  # (NUM_H1, 1)
         beta.reshape(NUM_H1, 1).astype(jnp.float32)],  # (NUM_H1, 1)
        axis=1,
    )  # (NUM_H1, NUM_P) -- closed over as a jit constant below

    @jax.jit
    def forward(x):
        B = x.shape[0]
        xt = x.astype(jnp.float32).T                    # (NUM_I, B)
        out_t = pl.pallas_call(
            mlp_bn_kernel,
            out_shape=jax.ShapeDtypeStruct((NUM_H1, B), jnp.float32),
            in_specs=[
                pl.BlockSpec((NUM_I, B), lambda: (0, 0)),
                pl.BlockSpec((NUM_H1, NUM_P), lambda: (0, 0)),
            ],
            out_specs=pl.BlockSpec((NUM_H1, B), lambda: (0, 0)),
        )(xt, params)
        # Transpose back to the PyTorch (B, NUM_H1) convention; keep consumers
        # in (NUM_H1, B) layout to make this free.
        return out_t.T

    return forward


if __name__ == "__main__":
    key = jax.random.PRNGKey(0)
    kx, kw, kb = jax.random.split(key, 3)

    B = 8  # batch (BatchNorm1d training mode needs B > 1)

    # Deterministic parameter init (mimics torch Linear's uniform init scale).
    bound = 1.0 / (NUM_I ** 0.5)
    w = jax.random.uniform(kw, (NUM_I, NUM_H1), jnp.float32, -bound, bound)
    b = jax.random.uniform(kb, (1, NUM_H1), jnp.float32, -bound, bound)
    gamma = jnp.ones((NUM_H1,), jnp.float32)   # BatchNorm1d default weight
    beta = jnp.zeros((NUM_H1,), jnp.float32)   # BatchNorm1d default bias

    x = jax.random.normal(kx, (B, NUM_I), jnp.float32)

    forward = make_mlp_bn(w, b, gamma, beta)
    out = forward(x)
    jax.block_until_ready(out)

    # Reference check in plain JAX (full torch semantics incl. the bias, which
    # cancels inside training-mode BN).
    y_ref = x @ w + b
    mu = y_ref.mean(axis=0, keepdims=True)
    var = ((y_ref - mu) ** 2).mean(axis=0, keepdims=True)
    ref = (y_ref - mu) / jnp.sqrt(var + BN_EPS) * gamma + beta
    assert out.shape == (B, NUM_H1)
    assert jnp.allclose(out, ref, atol=1e-4, rtol=1e-4), "mismatch vs reference"

    print("KERNEL_OK")
</pallas_src>

<mosaic_0001>
module attributes {stable_mosaic.version = 11 : i64} {
  func.func @mlp_bn_kernel(%arg0: memref<4x8xf32, #tpu.memory_space<vmem>>, %arg1: memref<16x6xf32, #tpu.memory_space<vmem>>, %arg2: memref<16x8xf32, #tpu.memory_space<vmem>>) attributes {dimension_semantics = [], scalar_prefetch = 0 : i64, scratch_operands = 0 : i64, tpu.core_type = #tpu.core_type<tc>} {
    %c0 = arith.constant 0 : index
    %c0_0 = arith.constant 0 : index
    %0 = vector.load %arg0[%c0, %c0_0] : memref<4x8xf32, #tpu.memory_space<vmem>>, vector<4x8xf32>
    %c0_1 = arith.constant 0 : index
    %c0_2 = arith.constant 0 : index
    %1 = vector.load %arg1[%c0_1, %c0_2] : memref<16x6xf32, #tpu.memory_space<vmem>>, vector<16x6xf32>
    %2 = vector.extract_strided_slice %1 {offsets = [0, 4], sizes = [16, 1], strides = [1, 1]} : vector<16x6xf32> to vector<16x1xf32>
    %3 = vector.extract_strided_slice %1 {offsets = [0, 5], sizes = [16, 1], strides = [1, 1]} : vector<16x6xf32> to vector<16x1xf32>
    %4 = vector.extract_strided_slice %1 {offsets = [0, 0], sizes = [16, 1], strides = [1, 1]} : vector<16x6xf32> to vector<16x1xf32>
    %5 = vector.extract_strided_slice %0 {offsets = [0, 0], sizes = [1, 8], strides = [1, 1]} : vector<4x8xf32> to vector<1x8xf32>
    %6 = vector.broadcast %4 : vector<16x1xf32> to vector<16x8xf32>
    %7 = vector.broadcast %5 : vector<1x8xf32> to vector<16x8xf32>
    %8 = arith.mulf %6, %7 : vector<16x8xf32>
    %9 = vector.extract_strided_slice %1 {offsets = [0, 1], sizes = [16, 1], strides = [1, 1]} : vector<16x6xf32> to vector<16x1xf32>
    %10 = vector.extract_strided_slice %0 {offsets = [1, 0], sizes = [1, 8], strides = [1, 1]} : vector<4x8xf32> to vector<1x8xf32>
    %11 = vector.broadcast %9 : vector<16x1xf32> to vector<16x8xf32>
    %12 = vector.broadcast %10 : vector<1x8xf32> to vector<16x8xf32>
    %13 = arith.mulf %11, %12 : vector<16x8xf32>
    %14 = arith.addf %8, %13 : vector<16x8xf32>
    %15 = vector.extract_strided_slice %1 {offsets = [0, 2], sizes = [16, 1], strides = [1, 1]} : vector<16x6xf32> to vector<16x1xf32>
    %16 = vector.extract_strided_slice %0 {offsets = [2, 0], sizes = [1, 8], strides = [1, 1]} : vector<4x8xf32> to vector<1x8xf32>
    %17 = vector.broadcast %15 : vector<16x1xf32> to vector<16x8xf32>
    %18 = vector.broadcast %16 : vector<1x8xf32> to vector<16x8xf32>
    %19 = arith.mulf %17, %18 : vector<16x8xf32>
    %20 = arith.addf %14, %19 : vector<16x8xf32>
    %21 = vector.extract_strided_slice %1 {offsets = [0, 3], sizes = [16, 1], strides = [1, 1]} : vector<16x6xf32> to vector<16x1xf32>
    %22 = vector.extract_strided_slice %0 {offsets = [3, 0], sizes = [1, 8], strides = [1, 1]} : vector<4x8xf32> to vector<1x8xf32>
    %23 = vector.broadcast %21 : vector<16x1xf32> to vector<16x8xf32>
    %24 = vector.broadcast %22 : vector<1x8xf32> to vector<16x8xf32>
    %25 = arith.mulf %23, %24 : vector<16x8xf32>
    %26 = arith.addf %20, %25 : vector<16x8xf32>
    %cst = arith.constant dense<0.000000e+00> : vector<16xf32>
    %27 = vector.multi_reduction <add>, %26, %cst [1] : vector<16x8xf32> to vector<16xf32>
    %28 = vector.shape_cast %27 : vector<16xf32> to vector<16x1xf32>
    %cst_3 = arith.constant 1.250000e-01 : f32
    %29 = vector.broadcast %cst_3 : f32 to vector<16x1xf32>
    %30 = arith.mulf %28, %29 : vector<16x1xf32>
    %31 = vector.broadcast %30 : vector<16x1xf32> to vector<16x8xf32>
    %32 = arith.subf %26, %31 : vector<16x8xf32>
    %33 = arith.mulf %32, %32 : vector<16x8xf32>
    %cst_4 = arith.constant dense<0.000000e+00> : vector<16xf32>
    %34 = vector.multi_reduction <add>, %33, %cst_4 [1] : vector<16x8xf32> to vector<16xf32>
    %35 = vector.shape_cast %34 : vector<16xf32> to vector<16x1xf32>
    %cst_5 = arith.constant 1.250000e-01 : f32
    %36 = vector.broadcast %cst_5 : f32 to vector<16x1xf32>
    %37 = arith.mulf %35, %36 : vector<16x1xf32>
    %cst_6 = arith.constant 9.99999974E-6 : f32
    %38 = vector.broadcast %cst_6 : f32 to vector<16x1xf32>
    %39 = arith.addf %37, %38 : vector<16x1xf32>
    %40 = math.rsqrt %39 : vector<16x1xf32>
    %41 = arith.mulf %2, %40 : vector<16x1xf32>
    %42 = vector.broadcast %41 : vector<16x1xf32> to vector<16x8xf32>
    %43 = arith.mulf %32, %42 : vector<16x8xf32>
    %44 = vector.broadcast %3 : vector<16x1xf32> to vector<16x8xf32>
    %45 = arith.addf %43, %44 : vector<16x8xf32>
    %c0_7 = arith.constant 0 : index
    %c0_8 = arith.constant 0 : index
    %46 = vector.load %arg2[%c0_7, %c0_8] : memref<16x8xf32, #tpu.memory_space<vmem>>, vector<16x8xf32>
    tpu.vector_store %arg2[%c0_7, %c0_8], %45 {strides = array<i32>} : memref<16x8xf32, #tpu.memory_space<vmem>>, vector<16x8xf32>,
    return
  }
}

</mosaic_0001>

<llo_original>
// kernel: forward.1
$region0: #{forward.1}
  #allocation0 [shape = 'u32[]', space=smem, size = 0x4, offset = 0x4, fixed_abs, tag = 'smem constant byte address 0x4 - core index']
  #allocation1 [shape = 'u32[72,128]{1,0:T(1,128)}', space=vmem, size = 0x9000, scoped, tag = 'internal scratch']
  %s0 = inlined_call_operand.hbm [shape: f32[4,8], index: 0, kind: input, shape index: {}]
  %s1 = inlined_call_operand.hbm [shape: f32[16,6], index: 1, kind: input, shape index: {}]
  %s2 = inlined_call_operand.vmem [shape: f32[16,8], index: 2, kind: output, shape index: {}]
  %s3 = sld [smem:[#allocation0]]
  $region26: #{forward.1} parent=0
    _
  %s5 = ssub.s32 1, %s3
  %s6 = scalar_select 0, %s5, %s3
  $region1: #{forward.1} parent=0
    #allocation2 [shape = 'u8[2048]{0}', space=vmem, size = 0x800, scoped, tag = 'input window, operand 0, single buffered']
    #allocation3 [shape = 's32[1]{0}', space=sflag, size = 0x4, scoped, tag = 'scoped memory for forward.1']
    #allocation4 [shape = 'u8[8192]{0}', space=vmem, size = 0x2000, scoped, tag = 'input window, operand 1, single buffered']
    #allocation5 [shape = 's32[1]{0}', space=sflag, size = 0x4, scoped, tag = 'scoped memory for forward.1']
    %7 = vsyncpa [#allocation3], 0
    %8 = vsyncpa [#allocation5], 0
    // Predicated region
    $region2: #{forward.1} parent=1 // pred_check
      _
    $region3: #{forward.1} parent=1 // pred_check_branch
      %10 = sbr.rel (0) target = $region5
    $region4: #{forward.1} parent=1 // pred_region
      %12 = vsyncadd [#allocation3], 0
      %s14 = sshll.u32 %s0, 4
      %s15 = int_to_ptr.hbm [resolvable:$true] %s14
      %s16 = sshll.u32 [#allocation2], 4
      %s17 = int_to_ptr.vmem [resolvable:$true] %s16
      %19 = dma.hbm_to_vmem [thread:$0]  %s15, 64, %s17, [#allocation3]
    $region5: #{forward.1} parent=1 // pred_fallthru
      _
    // Predicated region
    $region6: #{forward.1} parent=1 // pred_check
      _
    $region7: #{forward.1} parent=1 // pred_check_branch
      %21 = sbr.rel (0) target = $region9
    $region8: #{forward.1} parent=1 // pred_region
      %23 = vsyncadd [#allocation5], 0
      %s24 = sshll.u32 %s1, 4
      %s25 = int_to_ptr.hbm [resolvable:$true] %s24
      %s26 = sshll.u32 [#allocation4], 4
      %s27 = int_to_ptr.vmem [resolvable:$true] %s26
      %32 = dma.hbm_to_vmem [thread:$0]  %s25, 256, %s27, [#allocation5], 128, 128, 8
    $region9: #{forward.1} parent=1 // pred_fallthru
      _
    // Predicated region
    $region10: #{forward.1} parent=1 // pred_check
      _
    $region11: #{forward.1} parent=1 // pred_check_branch
      %34 = sbr.rel (0) target = $region13
    $region12: #{forward.1} parent=1 // pred_region
      %36 = dma.done [#allocation3], 64
    $region13: #{forward.1} parent=1 // pred_fallthru
      _
    // Predicated region
    $region14: #{forward.1} parent=1 // pred_check
      _
    $region15: #{forward.1} parent=1 // pred_check_branch
      %38 = sbr.rel (0) target = $region17
    $region16: #{forward.1} parent=1 // pred_region
      %40 = dma.done [#allocation5], 256
    $region17: #{forward.1} parent=1 // pred_fallthru
      _
    %v41 = vld [vmem:[#allocation2] sm:$0xf]
    %v42 = vld [vmem:[#allocation4] sm:$0xff]
    %v43 = vld [vmem:[#allocation4 + $0x8] sm:$0xff]
    %45 = vset.pattern.permute.xlu0 0
    %46 = vperm.xlu0 %45, %v42
    %v47 = vpop.permute.xlu0 %46
    %50 = vset.pattern.permute.xlu0 0
    %51 = vperm.xlu0 %50, %v43
    %v52 = vpop.permute.xlu0 %51
    %v54 = vperm.slane %v41, 0
    %v55 = vmul.f32 %v47, %v54
    %v56 = vmul.f32 %v52, %v54
    %57 = vset.pattern.permute.xlu0 1
    %58 = vperm.xlu0 %57, %v42
    %v59 = vpop.permute.xlu0 %58
    %61 = vset.pattern.permute.xlu0 1
    %62 = vperm.xlu0 %61, %v43
    %v63 = vpop.permute.xlu0 %62
    %v65 = vperm.slane %v41, 1
    %v66 = vmul.f32 %v59, %v65
    %v67 = vmul.f32 %v63, %v65
    %v68 = vadd.f32 %v55, %v66
    %v69 = vadd.f32 %v56, %v67
    %70 = vset.pattern.permute.xlu0 2
    %71 = vperm.xlu0 %70, %v42
    %v72 = vpop.permute.xlu0 %71
    %74 = vset.pattern.permute.xlu0 2
    %75 = vperm.xlu0 %74, %v43
    %v76 = vpop.permute.xlu0 %75
    %v78 = vperm.slane %v41, 2
    %v79 = vmul.f32 %v72, %v78
    %v80 = vmul.f32 %v76, %v78
    %v81 = vadd.f32 %v68, %v79
    %v82 = vadd.f32 %v69, %v80
    %83 = vset.pattern.permute.xlu0 3
    %84 = vperm.xlu0 %83, %v42
    %v85 = vpop.permute.xlu0 %84
    %87 = vset.pattern.permute.xlu0 3
    %88 = vperm.xlu0 %87, %v43
    %v89 = vpop.permute.xlu0 %88
    %v91 = vperm.slane %v41, 3
    %v92 = vmul.f32 %v85, %v91
    %v93 = vmul.f32 %v89, %v91
    %v94 = vadd.f32 %v81, %v92
    %v95 = vadd.f32 %v82, %v93
    %vm96 = vcmask 64512
    %v97 = vsel %vm96, %v94, 0.0
    %98 = vadd.xlane.f32.xlu0 %v97
    %v99 = vpop.xlane.xlu0 %98
    %v100 = vsel %vm96, %v95, 0.0
    %101 = vadd.xlane.f32.xlu0 %v100
    %v102 = vpop.xlane.xlu0 %101
    %v103 = vmul.f32 %v99, 0.125
    %v104 = vmul.f32 %v102, 0.125
    %v105 = vsub.f32 %v94, %v103
    %v106 = vsub.f32 %v95, %v104
    %v107 = vmul.f32 %v105, %v105
    %v108 = vmul.f32 %v106, %v106
    %v109 = vsel %vm96, %v107, 0.0
    %110 = vadd.xlane.f32.xlu0 %v109
    %v111 = vpop.xlane.xlu0 %110
    %v112 = vsel %vm96, %v108, 0.0
    %113 = vadd.xlane.f32.xlu0 %v112
    %v114 = vpop.xlane.xlu0 %113
    %v115 = vmul.f32 %v111, 0.125
    %v116 = vmul.f32 %v114, 0.125
    %v117 = vadd.f32 %v115, 1e-05
    %v118 = vadd.f32 %v116, 1e-05
    %v119 = vrsqrt.pop %v117
    %v120 = vmul.f32 %v119, %v117
    %v121 = vmul.f32 %v120, %v119
    %v122 = vmul.f32 0.5, %v121
    %v123 = vsub.f32 1.5, %v122
    %v124 = vmul.f32 %v119, %v123
    %vm125 = vweird.f32 %v117
    %vm126 = vweird.f32 %v119
    %vm127 = vmor %vm125, %vm126
    %v128 = vsel %vm127, %v119, %v124
    %v129 = vrsqrt.pop %v118
    %v130 = vmul.f32 %v129, %v118
    %v131 = vmul.f32 %v130, %v129
    %v132 = vmul.f32 0.5, %v131
    %v133 = vsub.f32 1.5, %v132
    %v134 = vmul.f32 %v129, %v133
    %vm135 = vweird.f32 %v118
    %vm136 = vweird.f32 %v129
    %vm137 = vmor %vm135, %vm136
    %v138 = vsel %vm137, %v129, %v134
    %v139 = vmul.f32 %v42, %v128
    %v140 = vmul.f32 %v43, %v138
    %142 = vset.pattern.permute.xlu0 4
    %143 = vperm.xlu0 %142, %v139
    %v144 = vpop.permute.xlu0 %143
    %147 = vset.pattern.permute.xlu0 4
    %148 = vperm.xlu0 %147, %v140
    %v149 = vpop.permute.xlu0 %148
    %v151 = vmul.f32 %v105, %v144
    %v152 = vmul.f32 %v106, %v149
    %153 = vset.pattern.permute.xlu0 5
    %154 = vperm.xlu0 %153, %v42
    %v155 = vpop.permute.xlu0 %154
    %157 = vset.pattern.permute.xlu0 5
    %158 = vperm.xlu0 %157, %v43
    %v159 = vpop.permute.xlu0 %158
    %v161 = vadd.f32 %v151, %v155
    %v162 = vadd.f32 %v152, %v159
    %163 = vst.msk [vmem:[%s2] sm:$0xff] %vm96, %v161
    %164 = vst.msk [vmem:[%s2 + $0x8] sm:$0xff] %vm96, %v162
    // Predicated region
    $region18: #{forward.1} parent=1 // pred_check
      _
    $region19: #{forward.1} parent=1 // pred_check_branch
      %166 = sbr.rel (0) target = $region21
    $region20: #{forward.1} parent=1 // pred_region
      _
    $region21: #{forward.1} parent=1 // pred_fallthru
      _
    // Predicated region
    $region22: #{forward.1} parent=1 // pred_check
      _
    $region23: #{forward.1} parent=1 // pred_check_branch
      %168 = sbr.rel (0) target = $region25
    $region24: #{forward.1} parent=1 // pred_region
      _
    $region25: #{forward.1} parent=1 // pred_fallthru
      _
    %169 = vsyncpa [#allocation3], 1
    %170 = vsyncpa [#allocation5], 1

</llo_original>
